<compile_context>
chip_gen: v7x
topology: tpu7x:2x2x1
jax: 0.10.0
libtpu: 0.0.40
codegen_flags: <defaults>
</compile_context>

<pallas_src>
import functools

import jax
import jax.numpy as jnp
from jax import lax
from jax.experimental import pallas as pl
from jax.experimental.pallas import tpu as pltpu


def _msa_kernel(*refs, num_groups, head_dim, inv_tau, has_mask):
    if has_mask:
        q_ref, k_ref, x_ref, mask_ref, ctx_ref, attn_ref = refs
    else:
        q_ref, k_ref, x_ref, ctx_ref, attn_ref = refs
        mask_ref = None

    q = q_ref[0]      # (TQ, D)  bf16, already scaled by scale / tau
    k = k_ref[0]      # (N,  C)  bf16, precomputed grouped key projection
    xv = x_ref[0]     # (N,  C)  bf16, the values (per-group channel slices)

    ctx_cols = []
    for g in range(num_groups):
        lo = g * head_dim
        k_g = k[:, lo:lo + head_dim]                           # (N, D)

        # s[i, j] = sum_d q[i, d] * k_g[j, d] — NT contraction on the MXU.
        s = lax.dot_general(q, k_g, dimension_numbers=(((1,), (1,)), ((), ())),
                            preferred_element_type=jnp.float32)  # (TQ, N) f32
        if mask_ref is not None:
            # Mask streamed in bf16; 1/tau applied here (VPU mul is free while
            # the kernel is HBM-bound).
            s = s + mask_ref[0, g].astype(jnp.float32) * inv_tau

        # Numerically stable softmax along the key axis (f32 statistics).
        m = jnp.max(s, axis=-1, keepdims=True)
        e = jnp.exp(s - m)
        denom = jnp.sum(e, axis=-1, keepdims=True)
        p = e * pl.reciprocal(denom, approx=True)                # EUP slot

        # Single bf16 cast reused for both the attn store and the PV matmul.
        p_bf = p.astype(jnp.bfloat16)
        attn_ref[0, g] = p_bf if attn_ref.dtype == jnp.bfloat16 \
            else p.astype(attn_ref.dtype)

        v_g = xv[:, lo:lo + head_dim]                            # (N, D) bf16
        ctx_cols.append(jnp.dot(p_bf, v_g,
                                preferred_element_type=jnp.float32))  # (TQ, D)

    # One lane-dense (TQ, C) store (no per-group masked partial stores).
    ctx = ctx_cols[0] if num_groups == 1 else jnp.concatenate(ctx_cols, axis=-1)
    ctx_ref[0] = ctx.astype(ctx_ref.dtype)


def _vmem_capacity_bytes():
    try:
        return int(pltpu.get_tpu_info().vmem_capacity_bytes)
    except Exception:
        return 64 * 1024 * 1024   # conservative (v7x per-TC)


def _choose_block_q(N, C, G, D, has_mask, attn_bytes, vmem_budget):
    """Largest query tile whose double-buffered working set fits the budget."""
    if N <= 512 or N % 128 != 0:
        # TODO(synk): pad ragged large N to a multiple of 128 (mask padded key
        # columns with -inf) instead of falling back to a single full-N tile.
        return N
    mask_bytes = 2 if has_mask else 0
    fixed = 4 * N * C * 2                              # K + V streams (bf16, 2-buf)
    for tq in (1024, 512, 256, 128):
        if N % tq:
            continue
        per_tile = (2 * tq * D * 2                     # q (bf16, 2-buf)
                    + 2 * tq * C * 4                   # ctx out (f32, 2-buf)
                    + 2 * G * tq * N * attn_bytes      # attn out (2-buf)
                    + 2 * G * tq * N * mask_bytes      # mask in (2-buf)
                    + 6 * tq * N * 4)                  # f32 softmax temporaries
        if fixed + per_tile <= vmem_budget:
            return tq
    return 128


def multi_segment_attention(x, q_w, q_b, k_w, k_b, attn_mask=None, tau=1.0,
                            num_groups=1, attn_dtype=jnp.bfloat16):
    """Pallas implementation of MultiSegmentAttention.forward.

    Args:
      x:    (B, N, C) float32
      q_w:  (D, C)    Linear weight (PyTorch convention: out x in)
      q_b:  (D,)      Linear bias
      k_w:  (C, D, 1) Conv1d weight (out_ch, in_ch/groups, kernel=1)
      k_b:  (C,)      Conv1d bias
      attn_mask: optional, reshapeable to (B, G, N, N)
      tau:  softmax temperature
      attn_dtype: dtype of the returned attention map.  bf16 (default) halves
        the dominant N^2 HBM write; use jnp.float32 for exact module dtype.
    Returns:
      context (B, N, C), attn_weight (B, G, N, N)
    """
    B, N, C = x.shape
    G = num_groups
    D = C // G
    scale = 1.0 / float(D) ** 0.5
    inv_tau = 1.0 / float(tau)

    # ---- trace-time glue (small O(N*C) GEMMs / casts, fused by XLA) ----
    x = x.astype(jnp.float32)
    # Shared q projection; scale and 1/tau folded in; bf16 MXU operand.
    q = ((x @ q_w.T + q_b) * (scale * inv_tau)).astype(jnp.bfloat16)   # (B,N,D)
    # Grouped 1x1-conv key projection as one batched GEMM, kept in the conv's
    # natural (B, N, C) channel layout (group g occupies channels [g*D,(g+1)*D)).
    wk = k_w.reshape(G, D, D)                                          # (g,out,in)
    xg = x.reshape(B, N, G, D)
    k = (jnp.einsum('bngi,goi->bngo', xg, wk)
         + k_b.reshape(G, D)).reshape(B, N, C).astype(jnp.bfloat16)    # (B,N,C)
    xv = x.astype(jnp.bfloat16)                                        # values

    has_mask = attn_mask is not None
    attn_bytes = jnp.dtype(attn_dtype).itemsize
    vmem_cap = _vmem_capacity_bytes()
    vmem_limit = max(min(vmem_cap - (8 << 20), 100 << 20), 16 << 20)
    block_q = _choose_block_q(N, C, G, D, has_mask, attn_bytes,
                              int(0.8 * vmem_limit))
    n_q_tiles = N // block_q

    in_specs = [
        pl.BlockSpec((1, block_q, D), lambda b, t: (b, t, 0)),   # q tile
        pl.BlockSpec((1, N, C), lambda b, t: (b, 0, 0)),         # K (per-batch resident)
        pl.BlockSpec((1, N, C), lambda b, t: (b, 0, 0)),         # V (per-batch resident)
    ]
    inputs = [q, k, xv]
    if has_mask:
        mask = jnp.asarray(attn_mask).reshape(B, G, N, N).astype(jnp.bfloat16)
        in_specs.append(
            pl.BlockSpec((1, G, block_q, N), lambda b, t: (b, 0, t, 0)))
        inputs.append(mask)

    kernel = functools.partial(_msa_kernel, num_groups=G, head_dim=D,
                               inv_tau=inv_tau, has_mask=has_mask)

    ctx, attn = pl.pallas_call(
        kernel,
        out_shape=(
            jax.ShapeDtypeStruct((B, N, C), x.dtype),
            jax.ShapeDtypeStruct((B, G, N, N), attn_dtype),
        ),
        grid_spec=pltpu.PrefetchScalarGridSpec(
            num_scalar_prefetch=0,
            grid=(B, n_q_tiles),
            in_specs=in_specs,
            out_specs=[
                pl.BlockSpec((1, block_q, C), lambda b, t: (b, t, 0)),
                pl.BlockSpec((1, G, block_q, N), lambda b, t: (b, 0, t, 0)),
            ],
        ),
        compiler_params=pltpu.CompilerParams(
            dimension_semantics=("parallel", "parallel"),
            vmem_limit_bytes=int(vmem_limit)),
    )(*inputs)

    return ctx, attn


def _reference(x, q_w, q_b, k_w, k_b, attn_mask, tau, num_groups):
    """Plain-JAX reference mirroring the PyTorch forward."""
    B, N, C = x.shape
    G = num_groups
    D = C // G
    scale = 1.0 / (D ** 0.5)
    q = x @ q_w.T + q_b                                    # (B, N, D)
    q = q[:, None]                                         # (B, 1, N, D)
    wk = k_w.reshape(C, D).reshape(G, D, D)
    xg = x.reshape(B, N, G, D)
    k = jnp.einsum('bngd,ged->bnge', xg, wk) + k_b.reshape(G, D)
    v = xg.transpose(0, 2, 1, 3)                           # (B, G, N, D)
    k = k.transpose(0, 2, 3, 1)                            # (B, G, D, N)
    s = jnp.einsum('band,bgdm->bgnm', q, k) * scale
    if attn_mask is not None:
        s = s + attn_mask.reshape(s.shape)
    s = s / tau
    p = jax.nn.softmax(s, axis=-1)
    ctx = jnp.einsum('bgnm,bgmd->bgnd', p, v)
    ctx = ctx.transpose(0, 2, 1, 3).reshape(B, N, C)
    return ctx, p


if __name__ == "__main__":
    key = jax.random.PRNGKey(0)
    B, N, C, G = 2, 16, 32, 4
    D = C // G
    tau = 0.7

    k1, k2, k3, k4, k5, k6 = jax.random.split(key, 6)
    x = jax.random.normal(k1, (B, N, C), dtype=jnp.float32)
    q_w = jax.random.normal(k2, (D, C), dtype=jnp.float32) * 0.1
    q_b = jax.random.normal(k3, (D,), dtype=jnp.float32) * 0.1
    k_w = jax.random.normal(k4, (C, D, 1), dtype=jnp.float32) * 0.1
    k_b = jax.random.normal(k5, (C,), dtype=jnp.float32) * 0.1
    attn_mask = jax.random.normal(k6, (B, G, N, N), dtype=jnp.float32) * 0.05

    # Masked variant.
    ctx, attn = multi_segment_attention(x, q_w, q_b, k_w, k_b,
                                        attn_mask=attn_mask, tau=tau,
                                        num_groups=G)
    # Mask-free variant (separate kernel; no dense zeros mask is streamed).
    ctx_nm, attn_nm = multi_segment_attention(x, q_w, q_b, k_w, k_b,
                                              attn_mask=None, tau=tau,
                                              num_groups=G)
    jax.block_until_ready((ctx, attn, ctx_nm, attn_nm))

    ctx_ref, attn_ref = _reference(x, q_w, q_b, k_w, k_b, attn_mask, tau, G)
    ctx_ref_nm, attn_ref_nm = _reference(x, q_w, q_b, k_w, k_b, None, tau, G)

    assert ctx.shape == (B, N, C) and attn.shape == (B, G, N, N)
    # Tolerances account for bf16 MXU operands, bf16 attn output and the
    # approximate (EUP) reciprocal in the softmax normalization.
    assert jnp.allclose(ctx, ctx_ref, atol=2e-2, rtol=2e-2)
    assert jnp.allclose(attn.astype(jnp.float32), attn_ref, atol=1e-2, rtol=2e-2)
    assert jnp.allclose(ctx_nm, ctx_ref_nm, atol=2e-2, rtol=2e-2)
    assert jnp.allclose(attn_nm.astype(jnp.float32), attn_ref_nm,
                        atol=1e-2, rtol=2e-2)
    print("KERNEL_OK")
</pallas_src>

<mosaic_0001>
module attributes {stable_mosaic.version = 11 : i64} {
  func.func @_msa_kernel(%arg0: i32, %arg1: i32, %arg2: memref<1x16x8xbf16, #tpu.memory_space<vmem>>, %arg3: memref<1x16x32xbf16, #tpu.memory_space<vmem>>, %arg4: memref<1x16x32xbf16, #tpu.memory_space<vmem>>, %arg5: memref<1x4x16x16xbf16, #tpu.memory_space<vmem>>, %arg6: memref<1x16x32xf32, #tpu.memory_space<vmem>>, %arg7: memref<1x4x16x16xbf16, #tpu.memory_space<vmem>>) attributes {dimension_semantics = [#tpu.dimension_semantics<parallel>, #tpu.dimension_semantics<parallel>], iteration_bounds = array<i64: 2, 1>, scalar_prefetch = 0 : i64, scratch_operands = 0 : i64, tpu.core_type = #tpu.core_type<tc>, window_params = [{transform_indices = @transform_0, window_bounds = array<i64: 1, 16, 8>}, {transform_indices = @transform_1, window_bounds = array<i64: 1, 16, 32>}, {transform_indices = @transform_2, window_bounds = array<i64: 1, 16, 32>}, {transform_indices = @transform_3, window_bounds = array<i64: 1, 4, 16, 16>}, {transform_indices = @transform_4, window_bounds = array<i64: 1, 16, 32>}, {transform_indices = @transform_5, window_bounds = array<i64: 1, 4, 16, 16>}]} {
    %c0 = arith.constant 0 : index
    %c0_0 = arith.constant 0 : index
    %c0_1 = arith.constant 0 : index
    %0 = vector.load %arg2[%c0, %c0_0, %c0_1] : memref<1x16x8xbf16, #tpu.memory_space<vmem>>, vector<1x16x8xbf16>
    %1 = vector.shape_cast %0 : vector<1x16x8xbf16> to vector<16x8xbf16>
    %c0_2 = arith.constant 0 : index
    %c0_3 = arith.constant 0 : index
    %c0_4 = arith.constant 0 : index
    %2 = vector.load %arg3[%c0_2, %c0_3, %c0_4] : memref<1x16x32xbf16, #tpu.memory_space<vmem>>, vector<1x16x32xbf16>
    %3 = vector.shape_cast %2 : vector<1x16x32xbf16> to vector<16x32xbf16>
    %c0_5 = arith.constant 0 : index
    %c0_6 = arith.constant 0 : index
    %c0_7 = arith.constant 0 : index
    %4 = vector.load %arg4[%c0_5, %c0_6, %c0_7] : memref<1x16x32xbf16, #tpu.memory_space<vmem>>, vector<1x16x32xbf16>
    %5 = vector.shape_cast %4 : vector<1x16x32xbf16> to vector<16x32xbf16>
    %6 = vector.extract_strided_slice %3 {offsets = [0, 0], sizes = [16, 8], strides = [1, 1]} : vector<16x32xbf16> to vector<16x8xbf16>
    %cst = arith.constant dense<0.000000e+00> : vector<16x16xf32>
    %7 = tpu.matmul %1, %6, %cst {dimension_numbers = #tpu.dot_dimension_numbers<[1], [1], [0], [0], [0, 0, 1, 0], [], []>} : vector<16x8xbf16>, vector<16x8xbf16>, vector<16x16xf32> -> vector<16x16xf32>
    %c0_8 = arith.constant 0 : index
    %c0_9 = arith.constant 0 : index
    %c0_10 = arith.constant 0 : index
    %c0_11 = arith.constant 0 : index
    %8 = vector.load %arg5[%c0_8, %c0_9, %c0_10, %c0_11] : memref<1x4x16x16xbf16, #tpu.memory_space<vmem>>, vector<1x1x16x16xbf16>
    %9 = vector.shape_cast %8 : vector<1x1x16x16xbf16> to vector<16x16xbf16>
    %10 = arith.extf %9 : vector<16x16xbf16> to vector<16x16xf32>
    %cst_12 = arith.constant 1.42857146 : f32
    %11 = vector.broadcast %cst_12 : f32 to vector<16x16xf32>
    %12 = arith.mulf %10, %11 : vector<16x16xf32>
    %13 = arith.addf %7, %12 : vector<16x16xf32>
    %cst_13 = arith.constant dense<0xFF800000> : vector<16xf32>
    %14 = vector.multi_reduction <maximumf>, %13, %cst_13 [1] : vector<16x16xf32> to vector<16xf32>
    %15 = vector.shape_cast %14 : vector<16xf32> to vector<16x1xf32>
    %16 = vector.broadcast %15 : vector<16x1xf32> to vector<16x16xf32>
    %17 = arith.subf %13, %16 : vector<16x16xf32>
    %18 = math.exp %17 : vector<16x16xf32>
    %cst_14 = arith.constant dense<0.000000e+00> : vector<16xf32>
    %19 = vector.multi_reduction <add>, %18, %cst_14 [1] : vector<16x16xf32> to vector<16xf32>
    %20 = vector.shape_cast %19 : vector<16xf32> to vector<16x1xf32>
    %21 = tpu.reciprocal %20 {approx = true} : vector<16x1xf32> -> vector<16x1xf32>
    %22 = vector.broadcast %21 : vector<16x1xf32> to vector<16x16xf32>
    %23 = arith.mulf %18, %22 : vector<16x16xf32>
    %24 = arith.truncf %23 : vector<16x16xf32> to vector<16x16xbf16>
    %c0_15 = arith.constant 0 : index
    %c0_16 = arith.constant 0 : index
    %c0_17 = arith.constant 0 : index
    %c0_18 = arith.constant 0 : index
    %25 = vector.load %arg7[%c0_15, %c0_16, %c0_17, %c0_18] : memref<1x4x16x16xbf16, #tpu.memory_space<vmem>>, vector<1x1x16x16xbf16>
    %26 = vector.shape_cast %25 : vector<1x1x16x16xbf16> to vector<16x16xbf16>
    %27 = vector.shape_cast %24 : vector<16x16xbf16> to vector<1x1x16x16xbf16>
    tpu.vector_store %arg7[%c0_15, %c0_16, %c0_17, %c0_18], %27 {strides = array<i32>} : memref<1x4x16x16xbf16, #tpu.memory_space<vmem>>, vector<1x1x16x16xbf16>,
    %28 = vector.extract_strided_slice %5 {offsets = [0, 0], sizes = [16, 8], strides = [1, 1]} : vector<16x32xbf16> to vector<16x8xbf16>
    %cst_19 = arith.constant dense<0.000000e+00> : vector<16x8xf32>
    %29 = tpu.matmul %24, %28, %cst_19 {dimension_numbers = #tpu.dot_dimension_numbers<[1], [0], [0], [1], [0, 0, 1, 1], [], []>} : vector<16x16xbf16>, vector<16x8xbf16>, vector<16x8xf32> -> vector<16x8xf32>
    %30 = vector.extract_strided_slice %3 {offsets = [0, 8], sizes = [16, 8], strides = [1, 1]} : vector<16x32xbf16> to vector<16x8xbf16>
    %cst_20 = arith.constant dense<0.000000e+00> : vector<16x16xf32>
    %31 = tpu.matmul %1, %30, %cst_20 {dimension_numbers = #tpu.dot_dimension_numbers<[1], [1], [0], [0], [0, 0, 1, 0], [], []>} : vector<16x8xbf16>, vector<16x8xbf16>, vector<16x16xf32> -> vector<16x16xf32>
    %c0_21 = arith.constant 0 : index
    %c1 = arith.constant 1 : index
    %c0_22 = arith.constant 0 : index
    %c0_23 = arith.constant 0 : index
    %32 = vector.load %arg5[%c0_21, %c1, %c0_22, %c0_23] : memref<1x4x16x16xbf16, #tpu.memory_space<vmem>>, vector<1x1x16x16xbf16>
    %33 = vector.shape_cast %32 : vector<1x1x16x16xbf16> to vector<16x16xbf16>
    %34 = arith.extf %33 : vector<16x16xbf16> to vector<16x16xf32>
    %cst_24 = arith.constant 1.42857146 : f32
    %35 = vector.broadcast %cst_24 : f32 to vector<16x16xf32>
    %36 = arith.mulf %34, %35 : vector<16x16xf32>
    %37 = arith.addf %31, %36 : vector<16x16xf32>
    %cst_25 = arith.constant dense<0xFF800000> : vector<16xf32>
    %38 = vector.multi_reduction <maximumf>, %37, %cst_25 [1] : vector<16x16xf32> to vector<16xf32>
    %39 = vector.shape_cast %38 : vector<16xf32> to vector<16x1xf32>
    %40 = vector.broadcast %39 : vector<16x1xf32> to vector<16x16xf32>
    %41 = arith.subf %37, %40 : vector<16x16xf32>
    %42 = math.exp %41 : vector<16x16xf32>
    %cst_26 = arith.constant dense<0.000000e+00> : vector<16xf32>
    %43 = vector.multi_reduction <add>, %42, %cst_26 [1] : vector<16x16xf32> to vector<16xf32>
    %44 = vector.shape_cast %43 : vector<16xf32> to vector<16x1xf32>
    %45 = tpu.reciprocal %44 {approx = true} : vector<16x1xf32> -> vector<16x1xf32>
    %46 = vector.broadcast %45 : vector<16x1xf32> to vector<16x16xf32>
    %47 = arith.mulf %42, %46 : vector<16x16xf32>
    %48 = arith.truncf %47 : vector<16x16xf32> to vector<16x16xbf16>
    %c0_27 = arith.constant 0 : index
    %c1_28 = arith.constant 1 : index
    %c0_29 = arith.constant 0 : index
    %c0_30 = arith.constant 0 : index
    %49 = vector.load %arg7[%c0_27, %c1_28, %c0_29, %c0_30] : memref<1x4x16x16xbf16, #tpu.memory_space<vmem>>, vector<1x1x16x16xbf16>
    %50 = vector.shape_cast %49 : vector<1x1x16x16xbf16> to vector<16x16xbf16>
    %51 = vector.shape_cast %48 : vector<16x16xbf16> to vector<1x1x16x16xbf16>
    tpu.vector_store %arg7[%c0_27, %c1_28, %c0_29, %c0_30], %51 {strides = array<i32>} : memref<1x4x16x16xbf16, #tpu.memory_space<vmem>>, vector<1x1x16x16xbf16>,
    %52 = vector.extract_strided_slice %5 {offsets = [0, 8], sizes = [16, 8], strides = [1, 1]} : vector<16x32xbf16> to vector<16x8xbf16>
    %cst_31 = arith.constant dense<0.000000e+00> : vector<16x8xf32>
    %53 = tpu.matmul %48, %52, %cst_31 {dimension_numbers = #tpu.dot_dimension_numbers<[1], [0], [0], [1], [0, 0, 1, 1], [], []>} : vector<16x16xbf16>, vector<16x8xbf16>, vector<16x8xf32> -> vector<16x8xf32>
    %54 = vector.extract_strided_slice %3 {offsets = [0, 16], sizes = [16, 8], strides = [1, 1]} : vector<16x32xbf16> to vector<16x8xbf16>
    %cst_32 = arith.constant dense<0.000000e+00> : vector<16x16xf32>
    %55 = tpu.matmul %1, %54, %cst_32 {dimension_numbers = #tpu.dot_dimension_numbers<[1], [1], [0], [0], [0, 0, 1, 0], [], []>} : vector<16x8xbf16>, vector<16x8xbf16>, vector<16x16xf32> -> vector<16x16xf32>
    %c0_33 = arith.constant 0 : index
    %c2 = arith.constant 2 : index
    %c0_34 = arith.constant 0 : index
    %c0_35 = arith.constant 0 : index
    %56 = vector.load %arg5[%c0_33, %c2, %c0_34, %c0_35] : memref<1x4x16x16xbf16, #tpu.memory_space<vmem>>, vector<1x1x16x16xbf16>
    %57 = vector.shape_cast %56 : vector<1x1x16x16xbf16> to vector<16x16xbf16>
    %58 = arith.extf %57 : vector<16x16xbf16> to vector<16x16xf32>
    %cst_36 = arith.constant 1.42857146 : f32
    %59 = vector.broadcast %cst_36 : f32 to vector<16x16xf32>
    %60 = arith.mulf %58, %59 : vector<16x16xf32>
    %61 = arith.addf %55, %60 : vector<16x16xf32>
    %cst_37 = arith.constant dense<0xFF800000> : vector<16xf32>
    %62 = vector.multi_reduction <maximumf>, %61, %cst_37 [1] : vector<16x16xf32> to vector<16xf32>
    %63 = vector.shape_cast %62 : vector<16xf32> to vector<16x1xf32>
    %64 = vector.broadcast %63 : vector<16x1xf32> to vector<16x16xf32>
    %65 = arith.subf %61, %64 : vector<16x16xf32>
    %66 = math.exp %65 : vector<16x16xf32>
    %cst_38 = arith.constant dense<0.000000e+00> : vector<16xf32>
    %67 = vector.multi_reduction <add>, %66, %cst_38 [1] : vector<16x16xf32> to vector<16xf32>
    %68 = vector.shape_cast %67 : vector<16xf32> to vector<16x1xf32>
    %69 = tpu.reciprocal %68 {approx = true} : vector<16x1xf32> -> vector<16x1xf32>
    %70 = vector.broadcast %69 : vector<16x1xf32> to vector<16x16xf32>
    %71 = arith.mulf %66, %70 : vector<16x16xf32>
    %72 = arith.truncf %71 : vector<16x16xf32> to vector<16x16xbf16>
    %c0_39 = arith.constant 0 : index
    %c2_40 = arith.constant 2 : index
    %c0_41 = arith.constant 0 : index
    %c0_42 = arith.constant 0 : index
    %73 = vector.load %arg7[%c0_39, %c2_40, %c0_41, %c0_42] : memref<1x4x16x16xbf16, #tpu.memory_space<vmem>>, vector<1x1x16x16xbf16>
    %74 = vector.shape_cast %73 : vector<1x1x16x16xbf16> to vector<16x16xbf16>
    %75 = vector.shape_cast %72 : vector<16x16xbf16> to vector<1x1x16x16xbf16>
    tpu.vector_store %arg7[%c0_39, %c2_40, %c0_41, %c0_42], %75 {strides = array<i32>} : memref<1x4x16x16xbf16, #tpu.memory_space<vmem>>, vector<1x1x16x16xbf16>,
    %76 = vector.extract_strided_slice %5 {offsets = [0, 16], sizes = [16, 8], strides = [1, 1]} : vector<16x32xbf16> to vector<16x8xbf16>
    %cst_43 = arith.constant dense<0.000000e+00> : vector<16x8xf32>
    %77 = tpu.matmul %72, %76, %cst_43 {dimension_numbers = #tpu.dot_dimension_numbers<[1], [0], [0], [1], [0, 0, 1, 1], [], []>} : vector<16x16xbf16>, vector<16x8xbf16>, vector<16x8xf32> -> vector<16x8xf32>
    %78 = vector.extract_strided_slice %3 {offsets = [0, 24], sizes = [16, 8], strides = [1, 1]} : vector<16x32xbf16> to vector<16x8xbf16>
    %cst_44 = arith.constant dense<0.000000e+00> : vector<16x16xf32>
    %79 = tpu.matmul %1, %78, %cst_44 {dimension_numbers = #tpu.dot_dimension_numbers<[1], [1], [0], [0], [0, 0, 1, 0], [], []>} : vector<16x8xbf16>, vector<16x8xbf16>, vector<16x16xf32> -> vector<16x16xf32>
    %c0_45 = arith.constant 0 : index
    %c3 = arith.constant 3 : index
    %c0_46 = arith.constant 0 : index
    %c0_47 = arith.constant 0 : index
    %80 = vector.load %arg5[%c0_45, %c3, %c0_46, %c0_47] : memref<1x4x16x16xbf16, #tpu.memory_space<vmem>>, vector<1x1x16x16xbf16>
    %81 = vector.shape_cast %80 : vector<1x1x16x16xbf16> to vector<16x16xbf16>
    %82 = arith.extf %81 : vector<16x16xbf16> to vector<16x16xf32>
    %cst_48 = arith.constant 1.42857146 : f32
    %83 = vector.broadcast %cst_48 : f32 to vector<16x16xf32>
    %84 = arith.mulf %82, %83 : vector<16x16xf32>
    %85 = arith.addf %79, %84 : vector<16x16xf32>
    %cst_49 = arith.constant dense<0xFF800000> : vector<16xf32>
    %86 = vector.multi_reduction <maximumf>, %85, %cst_49 [1] : vector<16x16xf32> to vector<16xf32>
    %87 = vector.shape_cast %86 : vector<16xf32> to vector<16x1xf32>
    %88 = vector.broadcast %87 : vector<16x1xf32> to vector<16x16xf32>
    %89 = arith.subf %85, %88 : vector<16x16xf32>
    %90 = math.exp %89 : vector<16x16xf32>
    %cst_50 = arith.constant dense<0.000000e+00> : vector<16xf32>
    %91 = vector.multi_reduction <add>, %90, %cst_50 [1] : vector<16x16xf32> to vector<16xf32>
    %92 = vector.shape_cast %91 : vector<16xf32> to vector<16x1xf32>
    %93 = tpu.reciprocal %92 {approx = true} : vector<16x1xf32> -> vector<16x1xf32>
    %94 = vector.broadcast %93 : vector<16x1xf32> to vector<16x16xf32>
    %95 = arith.mulf %90, %94 : vector<16x16xf32>
    %96 = arith.truncf %95 : vector<16x16xf32> to vector<16x16xbf16>
    %c0_51 = arith.constant 0 : index
    %c3_52 = arith.constant 3 : index
    %c0_53 = arith.constant 0 : index
    %c0_54 = arith.constant 0 : index
    %97 = vector.load %arg7[%c0_51, %c3_52, %c0_53, %c0_54] : memref<1x4x16x16xbf16, #tpu.memory_space<vmem>>, vector<1x1x16x16xbf16>
    %98 = vector.shape_cast %97 : vector<1x1x16x16xbf16> to vector<16x16xbf16>
    %99 = vector.shape_cast %96 : vector<16x16xbf16> to vector<1x1x16x16xbf16>
    tpu.vector_store %arg7[%c0_51, %c3_52, %c0_53, %c0_54], %99 {strides = array<i32>} : memref<1x4x16x16xbf16, #tpu.memory_space<vmem>>, vector<1x1x16x16xbf16>,
    %100 = vector.extract_strided_slice %5 {offsets = [0, 24], sizes = [16, 8], strides = [1, 1]} : vector<16x32xbf16> to vector<16x8xbf16>
    %cst_55 = arith.constant dense<0.000000e+00> : vector<16x8xf32>
    %101 = tpu.matmul %96, %100, %cst_55 {dimension_numbers = #tpu.dot_dimension_numbers<[1], [0], [0], [1], [0, 0, 1, 1], [], []>} : vector<16x16xbf16>, vector<16x8xbf16>, vector<16x8xf32> -> vector<16x8xf32>
    %102 = tpu.concatenate %29, %53, %77, %101 in 1 : vector<16x8xf32>, vector<16x8xf32>, vector<16x8xf32>, vector<16x8xf32> -> vector<16x32xf32>
    %c0_56 = arith.constant 0 : index
    %c0_57 = arith.constant 0 : index
    %c0_58 = arith.constant 0 : index
    %103 = vector.load %arg6[%c0_56, %c0_57, %c0_58] : memref<1x16x32xf32, #tpu.memory_space<vmem>>, vector<1x16x32xf32>
    %104 = vector.shape_cast %103 : vector<1x16x32xf32> to vector<16x32xf32>
    %105 = vector.shape_cast %102 : vector<16x32xf32> to vector<1x16x32xf32>
    tpu.vector_store %arg6[%c0_56, %c0_57, %c0_58], %105 {strides = array<i32>} : memref<1x16x32xf32, #tpu.memory_space<vmem>>, vector<1x16x32xf32>,
    return
  }
  func.func @transform_0(%arg0: i32, %arg1: i32) -> (i32, i32, i32) {
    %c0_i32 = arith.constant 0 : i32
    %c0_i32_0 = arith.constant 0 : i32
    return %arg0, %arg1, %c0_i32 : i32, i32, i32
  }
  func.func @transform_1(%arg0: i32, %arg1: i32) -> (i32, i32, i32) {
    %c0_i32 = arith.constant 0 : i32
    %c0_i32_0 = arith.constant 0 : i32
    %c0_i32_1 = arith.constant 0 : i32
    return %arg0, %c0_i32, %c0_i32_0 : i32, i32, i32
  }
  func.func @transform_2(%arg0: i32, %arg1: i32) -> (i32, i32, i32) {
    %c0_i32 = arith.constant 0 : i32
    %c0_i32_0 = arith.constant 0 : i32
    %c0_i32_1 = arith.constant 0 : i32
    return %arg0, %c0_i32, %c0_i32_0 : i32, i32, i32
  }
  func.func @transform_3(%arg0: i32, %arg1: i32) -> (i32, i32, i32, i32) {
    %c0_i32 = arith.constant 0 : i32
    %c0_i32_0 = arith.constant 0 : i32
    %c0_i32_1 = arith.constant 0 : i32
    return %arg0, %c0_i32, %arg1, %c0_i32_0 : i32, i32, i32, i32
  }
  func.func @transform_4(%arg0: i32, %arg1: i32) -> (i32, i32, i32) {
    %c0_i32 = arith.constant 0 : i32
    %c0_i32_0 = arith.constant 0 : i32
    return %arg0, %arg1, %c0_i32 : i32, i32, i32
  }
  func.func @transform_5(%arg0: i32, %arg1: i32) -> (i32, i32, i32, i32) {
    %c0_i32 = arith.constant 0 : i32
    %c0_i32_0 = arith.constant 0 : i32
    %c0_i32_1 = arith.constant 0 : i32
    return %arg0, %c0_i32, %arg1, %c0_i32_0 : i32, i32, i32, i32
  }
}

</mosaic_0001>

<llo_original>
// kernel: tpu_custom_call.1
$region0: #{tpu_custom_call.1}
  #allocation0 [shape = 'u32[]', space=smem, size = 0x4, offset = 0x4, fixed_abs, tag = 'smem constant byte address 0x4 - core index']
  #allocation1 [shape = 'u32[144,128]{1,0:T(1,128)}', space=vmem, size = 0x12000, scoped, tag = 'internal scratch']
  %s0 = inlined_call_operand.vmem [shape: bf16[2,16,8], index: 0, kind: input, shape index: {}]
  %s1 = inlined_call_operand.vmem [shape: bf16[2,16,32], index: 1, kind: input, shape index: {}]
  %s2 = inlined_call_operand.hbm [shape: bf16[2,16,32], index: 2, kind: input, shape index: {}]
  %s3 = inlined_call_operand.hbm [shape: bf16[2,4,16,16], index: 3, kind: input, shape index: {}]
  %s4 = inlined_call_operand.hbm [shape: f32[2,16,32], index: 4, kind: output, shape index: {0}]
  %s5 = inlined_call_operand.hbm [shape: bf16[2,4,16,16], index: 5, kind: output, shape index: {1}]
  %6 = xla_tuple %s4, %s5
  %s7 = sld [smem:[#allocation0]]
  $region65: #{tpu_custom_call.1} parent=0
    _
  %s9 = ssub.s32 1, %s7
  %s10 = scalar_select 0, %s9, %s7
  $region1: #{tpu_custom_call.1} parent=0
    #allocation2 [shape = 'u8[8192]{0}', space=vmem, size = 0x2000, scoped, tag = 'input window, operand 2']
    #allocation3 [shape = 's32[2]{0}', space=sflag, size = 0x8, scoped, tag = 'scoped memory for tpu_custom_call.1']
    #allocation4 [shape = 's32[2]{0}', space=sflag, size = 0x8, scoped, tag = 'scoped memory for tpu_custom_call.1']
    #allocation5 [shape = 'u8[32768]{0}', space=vmem, size = 0x8000, scoped, tag = 'input window, operand 3']
    #allocation6 [shape = 's32[2]{0}', space=sflag, size = 0x8, scoped, tag = 'scoped memory for tpu_custom_call.1']
    #allocation7 [shape = 'u8[16384]{0}', space=vmem, size = 0x4000, scoped, tag = 'output window, operand 0']
    #allocation8 [shape = 'u8[32768]{0}', space=vmem, size = 0x8000, scoped, tag = 'output window, operand 1']
    #allocation9 [shape = 's32[2]{0}', space=sflag, size = 0x8, scoped, tag = 'scoped memory for tpu_custom_call.1']
    %11 = vsyncpa [#allocation3], 0
    %s12 = scalar_lea.sflag [#allocation3], 1
    %13 = vsyncpa %s12, 0
    %14 = vsyncpa [#allocation6], 0
    %s15 = scalar_lea.sflag [#allocation6], 1
    %16 = vsyncpa %s15, 0
    %17 = vsyncpa [#allocation4], 0
    %s18 = scalar_lea.sflag [#allocation4], 1
    %19 = vsyncpa %s18, 0
    %20 = vsyncpa [#allocation9], 0
    %s21 = scalar_lea.sflag [#allocation9], 1
    %22 = vsyncpa %s21, 0
    loop: start=0, step=1, limit=4
    $region2: #{tpu_custom_call.1} parent=1 // loop_pre_header
      _
    $region3: #{tpu_custom_call.1} parent=1 // loop_header
      %s24 = sphi 0, %s28
      %p25 = scmp.ge.s32.totalorder %s24, 4
      %s31 = sphi 0, %s43
      %s32 = sphi 0, %s39
      %s33 = sphi 0, %s31
      %s34 = sphi 0, %s32
      %s35 = sphi 0, %s33
      %s36 = sphi 0, %s34
      %s48 = sphi 0, %s50
      %s51 = sphi 0, %s48
      %s52 = sphi 0, %s51
      %s68 = sphi 0, %s52
      %s74 = sphi 0, %s76
      %s77 = sphi 0, %s74
      %s78 = sphi 0, %s77
      %s94 = sphi 0, %s78
      %s100 = sphi 0, %s102
      %s103 = sphi 0, %s100
      %s104 = sphi 0, %s103
      %s120 = sphi 0, %s104
      %s128 = sphi 0, %s130
      %s131 = sphi 0, %s128
      %s132 = sphi 0, %s131
      %s148 = sphi 0, %s132
      %s156 = sphi 0, %s158
      %s159 = sphi 0, %s156
      %s160 = sphi 0, %s159
      %s176 = sphi 0, %s160
      %s184 = sphi 0, %s186
      %s187 = sphi 0, %s184
      %s188 = sphi 0, %s187
      %s204 = sphi 0, %s188
    $region4: #{tpu_custom_call.1} parent=1 // loop_header_branch
      %27 = sbr.rel (%p25) target = $region8
    $region5: #{tpu_custom_call.1} parent=1 // loop_body
      %s29 = ssub.s32 %s24, 1
      %s30 = ssub.s32 %s24, 2
      %s37 = sadd.s32 1, %s32
      %p38 = scmp.ge.s32.totalorder %s37, 1
      %s39 = scalar_select %p38, 0, %s37
      %s40 = sadd.s32 1, %s31
      %s41 = scalar_select %p38, %s40, %s31
      %p42 = scmp.ge.s32.totalorder %s41, 2
      %s43 = scalar_select %p42, 0, %s41
      %s44 = ssub.s32 %s31, %s43
      %s45 = ssub.s32 %s32, %s39
      %s46 = sor.u32 %s44, %s45
      %p47 = scmp.eq.s32.totalorder %s46, 0
      %s49 = sadd.s32 %s48, 1
      %s50 = scalar_select %p47, %s48, %s49
      %p53 = pneg %p47
      %p54 = scmp.eq.s32.totalorder %s24, 1
      %p55 = por %p53, %p54
      %p56 = scmp.ne.s32.totalorder %s48, %s51
      %p57 = scmp.eq.s32.totalorder %s24, 0
      %p58 = por %p56, %p57
      %p59 = scmp.ne.s32.totalorder %s48, %s51
      %p60 = scmp.eq.s32.totalorder %s29, 1
      %p61 = por %p59, %p60
      %p62 = scmp.ne.s32.totalorder %s51, %s52
      %p63 = scmp.eq.s32.totalorder %s29, 0
      %p64 = por %p62, %p63
      %p65 = scmp.ne.s32.totalorder %s51, %s52
      %p66 = scmp.eq.s32.totalorder %s30, 1
      %p67 = por %p65, %p66
      %p69 = scmp.ne.s32.totalorder %s52, %s68
      %p70 = scmp.eq.s32.totalorder %s30, 0
      %p71 = por %p69, %p70
      %s72 = ssub.s32 %s31, %s43
      %p73 = scmp.eq.s32.totalorder %s72, 0
      %s75 = sadd.s32 %s74, 1
      %s76 = scalar_select %p73, %s74, %s75
      %p79 = pneg %p73
      %p80 = scmp.eq.s32.totalorder %s24, 1
      %p81 = por %p79, %p80
      %p82 = scmp.ne.s32.totalorder %s74, %s77
      %p83 = scmp.eq.s32.totalorder %s24, 0
      %p84 = por %p82, %p83
      %p85 = scmp.ne.s32.totalorder %s74, %s77
      %p86 = scmp.eq.s32.totalorder %s29, 1
      %p87 = por %p85, %p86
      %p88 = scmp.ne.s32.totalorder %s77, %s78
      %p89 = scmp.eq.s32.totalorder %s29, 0
      %p90 = por %p88, %p89
      %p91 = scmp.ne.s32.totalorder %s77, %s78
      %p92 = scmp.eq.s32.totalorder %s30, 1
      %p93 = por %p91, %p92
      %p95 = scmp.ne.s32.totalorder %s78, %s94
      %p96 = scmp.eq.s32.totalorder %s30, 0
      %p97 = por %p95, %p96
      %s98 = ssub.s32 %s31, %s43
      %p99 = scmp.eq.s32.totalorder %s98, 0
      %s101 = sadd.s32 %s100, 1
      %s102 = scalar_select %p99, %s100, %s101
      %p105 = pneg %p99
      %p106 = scmp.eq.s32.totalorder %s24, 1
      %p107 = por %p105, %p106
      %p108 = scmp.ne.s32.totalorder %s100, %s103
      %p109 = scmp.eq.s32.totalorder %s24, 0
      %p110 = por %p108, %p109
      %p111 = scmp.ne.s32.totalorder %s100, %s103
      %p112 = scmp.eq.s32.totalorder %s29, 1
      %p113 = por %p111, %p112
      %p114 = scmp.ne.s32.totalorder %s103, %s104
      %p115 = scmp.eq.s32.totalorder %s29, 0
      %p116 = por %p114, %p115
      %p117 = scmp.ne.s32.totalorder %s103, %s104
      %p118 = scmp.eq.s32.totalorder %s30, 1
      %p119 = por %p117, %p118
      %p121 = scmp.ne.s32.totalorder %s104, %s120
      %p122 = scmp.eq.s32.totalorder %s30, 0
      %p123 = por %p121, %p122
      %s124 = ssub.s32 %s31, %s43
      %s125 = ssub.s32 %s32, %s39
      %s126 = sor.u32 %s124, %s125
      %p127 = scmp.eq.s32.totalorder %s126, 0
      %s129 = sadd.s32 %s128, 1
      %s130 = scalar_select %p127, %s128, %s129
      %p133 = pneg %p127
      %p134 = scmp.eq.s32.totalorder %s24, 1
      %p135 = por %p133, %p134
      %p136 = scmp.ne.s32.totalorder %s128, %s131
      %p137 = scmp.eq.s32.totalorder %s24, 0
      %p138 = por %p136, %p137
      %p139 = scmp.ne.s32.totalorder %s128, %s131
      %p140 = scmp.eq.s32.totalorder %s29, 1
      %p141 = por %p139, %p140
      %p142 = scmp.ne.s32.totalorder %s131, %s132
      %p143 = scmp.eq.s32.totalorder %s29, 0
      %p144 = por %p142, %p143
      %p145 = scmp.ne.s32.totalorder %s131, %s132
      %p146 = scmp.eq.s32.totalorder %s30, 1
      %p147 = por %p145, %p146
      %p149 = scmp.ne.s32.totalorder %s132, %s148
      %p150 = scmp.eq.s32.totalorder %s30, 0
      %p151 = por %p149, %p150
      %s152 = ssub.s32 %s31, %s43
      %s153 = ssub.s32 %s32, %s39
      %s154 = sor.u32 %s152, %s153
      %p155 = scmp.eq.s32.totalorder %s154, 0
      %s157 = sadd.s32 %s156, 1
      %s158 = scalar_select %p155, %s156, %s157
      %p161 = pneg %p155
      %p162 = scmp.eq.s32.totalorder %s24, 1
      %p163 = por %p161, %p162
      %p164 = scmp.ne.s32.totalorder %s156, %s159
      %p165 = scmp.eq.s32.totalorder %s24, 0
      %p166 = por %p164, %p165
      %p167 = scmp.ne.s32.totalorder %s156, %s159
      %p168 = scmp.eq.s32.totalorder %s29, 1
      %p169 = por %p167, %p168
      %p170 = scmp.ne.s32.totalorder %s159, %s160
      %p171 = scmp.eq.s32.totalorder %s29, 0
      %p172 = por %p170, %p171
      %p173 = scmp.ne.s32.totalorder %s159, %s160
      %p174 = scmp.eq.s32.totalorder %s30, 1
      %p175 = por %p173, %p174
      %p177 = scmp.ne.s32.totalorder %s160, %s176
      %p178 = scmp.eq.s32.totalorder %s30, 0
      %p179 = por %p177, %p178
      %s180 = ssub.s32 %s31, %s43
      %s181 = ssub.s32 %s32, %s39
      %s182 = sor.u32 %s180, %s181
      %p183 = scmp.eq.s32.totalorder %s182, 0
      %s185 = sadd.s32 %s184, 1
      %s186 = scalar_select %p183, %s184, %s185
      %p189 = pneg %p183
      %p190 = scmp.eq.s32.totalorder %s24, 1
      %p191 = por %p189, %p190
      %p192 = scmp.ne.s32.totalorder %s184, %s187
      %p193 = scmp.eq.s32.totalorder %s24, 0
      %p194 = por %p192, %p193
      %p195 = scmp.ne.s32.totalorder %s184, %s187
      %p196 = scmp.eq.s32.totalorder %s29, 1
      %p197 = por %p195, %p196
      %p198 = scmp.ne.s32.totalorder %s187, %s188
      %p199 = scmp.eq.s32.totalorder %s29, 0
      %p200 = por %p198, %p199
      %p201 = scmp.ne.s32.totalorder %s187, %s188
      %p202 = scmp.eq.s32.totalorder %s30, 1
      %p203 = por %p201, %p202
      %p205 = scmp.ne.s32.totalorder %s188, %s204
      %p206 = scmp.eq.s32.totalorder %s30, 0
      %p207 = por %p205, %p206
      %p208 = scmp.le.s32.totalorder 1, %s24
      %p209 = scmp.lt.s32.totalorder %s24, 3
      %p210 = pnand %p208, %p209
      %p211 = pneg %p210
      // Predicated region
      $region9: #{tpu_custom_call.1} parent=5 // pred_check
        _
      $region10: #{tpu_custom_call.1} parent=5 // pred_check_branch
        %213 = sbr.rel (%p210) target = $region12
      $region11: #{tpu_custom_call.1} parent=5 // pred_region
        %s214 = ssub.s32 %s24, 1
      $region12: #{tpu_custom_call.1} parent=5 // pred_fallthru
        _
      %p215 = scmp.lt.s32.totalorder %s24, 2
      // Predicated region
      $region13: #{tpu_custom_call.1} parent=5 // pred_check
        %p216 = pneg %p215
      $region14: #{tpu_custom_call.1} parent=5 // pred_check_branch
        %218 = sbr.rel (%p216) target = $region16
      $region15: #{tpu_custom_call.1} parent=5 // pred_region
        // Predicated region
        $region17: #{tpu_custom_call.1} parent=15 // pred_check
          %p219 = pneg %p58
        $region18: #{tpu_custom_call.1} parent=15 // pred_check_branch
          %221 = sbr.rel (%p219) target = $region20
        $region19: #{tpu_custom_call.1} parent=15 // pred_region
          %s222 = smul.u32 2, %s32
          %p223 = scmp.lt.s32.totalorder %s31, 1
          %s224 = scalar_select %p223, %s31, 1
          %p225 = scmp.lt.s32.totalorder %s222, 1
          %s226 = scalar_select %p225, %s222, 1
          %s227 = smul.addr %s224, 2
          %s228 = sadd.s32 %s226, %s227
          %s229 = smul.addr %s228, 4
          %s230 = scalar_lea.vmem %s0, %s229
          %s231 = smul.u32 2, %s32
        $region20: #{tpu_custom_call.1} parent=15 // pred_fallthru
          _
        // Predicated region
        $region21: #{tpu_custom_call.1} parent=15 // pred_check
          %p232 = pneg %p84
        $region22: #{tpu_custom_call.1} parent=15 // pred_check_branch
          %234 = sbr.rel (%p232) target = $region24
        $region23: #{tpu_custom_call.1} parent=15 // pred_region
          %p235 = scmp.lt.s32.totalorder %s31, 1
          %s236 = scalar_select %p235, %s31, 1
          %s237 = smul.addr %s236, 2
          %s238 = smul.addr %s237, 4
          %s239 = scalar_lea.vmem %s1, %s238
        $region24: #{tpu_custom_call.1} parent=15 // pred_fallthru
          _
        // Predicated region
        $region25: #{tpu_custom_call.1} parent=15 // pred_check
          %p240 = pneg %p110
        $region26: #{tpu_custom_call.1} parent=15 // pred_check_branch
          %242 = sbr.rel (%p240) target = $region28
        $region27: #{tpu_custom_call.1} parent=15 // pred_region
          %s243 = sand.u32 %s100, 1
          %s244 = scalar_lea.sflag [#allocation3], %s243
          %s245 = sand.u32 %s100, 1
          %s246 = smul.addr %s245, 8
          %s247 = scalar_lea.vmem [#allocation2], %s246
          %s249 = ssub.s32 128, 128
          %250 = vsyncadd %s244, %s249
          %s251 = smul.addr %s31, 2
          %s252 = smul.addr %s251, 64
          %s253 = scalar_lea.hbm %s2, %s252
          %s254 = sshll.u32 %s247, 4
          %s255 = int_to_ptr.vmem [resolvable:$true] %s254
          %260 = dma.hbm_to_vmem [thread:$0]  %s253, 128, %s255, %s244, 64, 64, 4
        $region28: #{tpu_custom_call.1} parent=15 // pred_fallthru
          _
        // Predicated region
        $region29: #{tpu_custom_call.1} parent=15 // pred_check
          %p261 = pneg %p138
        $region30: #{tpu_custom_call.1} parent=15 // pred_check_branch
          %263 = sbr.rel (%p261) target = $region32
        $region31: #{tpu_custom_call.1} parent=15 // pred_region
          %s264 = sand.u32 %s128, 1
          %s265 = scalar_lea.sflag [#allocation6], %s264
          %s266 = sand.u32 %s128, 1
          %s267 = smul.addr %s266, 32
          %s268 = scalar_lea.vmem [#allocation5], %s267
          %s269 = smul.u32 2, %s32
          %s271 = ssub.s32 512, 512
          %272 = vsyncadd %s265, %s271
          %s273 = smul.addr %s31, 8
          %s274 = sadd.s32 %s269, %s273
          %s275 = smul.addr %s274, 64
          %s276 = scalar_lea.hbm %s3, %s275
          %s277 = sshll.u32 %s268, 4
          %s278 = int_to_ptr.vmem [resolvable:$true] %s277
          %283 = dma.hbm_to_vmem [thread:$0]  %s276, 512, %s278, %s265, 64, 64, 4
        $region32: #{tpu_custom_call.1} parent=15 // pred_fallthru
          _
      $region16: #{tpu_custom_call.1} parent=5 // pred_fallthru
        _
      %p284 = scmp.le.s32.totalorder 1, %s24
      %p285 = scmp.lt.s32.totalorder %s24, 3
      %p286 = pnand %p284, %p285
      %p287 = pneg %p286
      // Predicated region
      $region33: #{tpu_custom_call.1} parent=5 // pred_check
        _
      $region34: #{tpu_custom_call.1} parent=5 // pred_check_branch
        %289 = sbr.rel (%p286) target = $region36
      $region35: #{tpu_custom_call.1} parent=5 // pred_region
        %s290 = ssub.s32 %s24, 1
        %s291 = sand.u32 %s103, 1
        %s292 = scalar_lea.sflag [#allocation3], %s291
        %s293 = sand.u32 %s103, 1
        %s294 = smul.addr %s293, 8
        %s295 = scalar_lea.vmem [#allocation2], %s294
        // Predicated region
        $region37: #{tpu_custom_call.1} parent=35 // pred_check
          %p296 = pneg %p116
        $region38: #{tpu_custom_call.1} parent=35 // pred_check_branch
          %298 = sbr.rel (%p296) target = $region40
        $region39: #{tpu_custom_call.1} parent=35 // pred_region
          %299 = dma.done %s292, 128
        $region40: #{tpu_custom_call.1} parent=35 // pred_fallthru
          _
        %s300 = sand.u32 %s131, 1
        %s301 = scalar_lea.sflag [#allocation6], %s300
        %s302 = sand.u32 %s131, 1
        %s303 = smul.addr %s302, 32
        %s304 = scalar_lea.vmem [#allocation5], %s303
        // Predicated region
        $region41: #{tpu_custom_call.1} parent=35 // pred_check
          %p305 = pneg %p144
        $region42: #{tpu_custom_call.1} parent=35 // pred_check_branch
          %307 = sbr.rel (%p305) target = $region44
        $region43: #{tpu_custom_call.1} parent=35 // pred_region
          %308 = dma.done %s301, 512
        $region44: #{tpu_custom_call.1} parent=35 // pred_fallthru
          _
        %s309 = smul.u32 2, %s34
        %p310 = scmp.lt.s32.totalorder %s33, 1
        %s311 = scalar_select %p310, %s33, 1
        %p312 = scmp.lt.s32.totalorder %s309, 1
        %s313 = scalar_select %p312, %s309, 1
        %s314 = smul.addr %s311, 2
        %s315 = sadd.s32 %s313, %s314
        %s316 = smul.addr %s315, 4
        %s317 = scalar_lea.vmem %s0, %s316
        %p318 = pneg %p64
        %p319 = pneg %p61
        %p320 = scmp.lt.s32.totalorder %s33, 1
        %s321 = scalar_select %p320, %s33, 1
        %s322 = smul.addr %s321, 2
        %s323 = smul.addr %s322, 4
        %s324 = scalar_lea.vmem %s1, %s323
        %p325 = pneg %p90
        %p326 = pneg %p87
        %s327 = sand.u32 %s103, 1
        %s328 = scalar_lea.sflag [#allocation3], %s327
        %s329 = sand.u32 %s103, 1
        %s330 = smul.addr %s329, 8
        %s331 = scalar_lea.vmem [#allocation2], %s330
        %p332 = pneg %p116
        %p333 = pneg %p113
        %s334 = sand.u32 %s131, 1
        %s335 = scalar_lea.sflag [#allocation6], %s334
        %s336 = sand.u32 %s131, 1
        %s337 = smul.addr %s336, 32
        %s338 = scalar_lea.vmem [#allocation5], %s337
        %p339 = pneg %p144
        %p340 = pneg %p141
        %p341 = pneg %p172
        %p342 = pneg %p169
        %s343 = sand.u32 %s159, 1
        %s344 = scalar_lea.sflag [#allocation4], %s343
        %s345 = sand.u32 %s159, 1
        %s346 = smul.addr %s345, 16
        %s347 = scalar_lea.vmem [#allocation7], %s346
        %p348 = pneg %p200
        %p349 = pneg %p197
        %s350 = sand.u32 %s187, 1
        %s351 = scalar_lea.sflag [#allocation9], %s350
        %s352 = sand.u32 %s187, 1
        %s353 = smul.addr %s352, 32
        %s354 = scalar_lea.vmem [#allocation8], %s353
        %s355 = smul.u32 2, %s34
        %p356 = scmp.lt.s32.totalorder %s33, 1
        %s357 = scalar_select %p356, %s33, 1
        %p358 = scmp.lt.s32.totalorder %s355, 1
        %s359 = scalar_select %p358, %s355, 1
        %s360 = smul.addr %s357, 2
        %s361 = sadd.s32 %s359, %s360
        %s362 = smul.addr %s361, 4
        %s363 = scalar_lea.vmem %s0, %s362
        %s364 = smul.u32 2, %s34
        %p365 = scmp.lt.s32.totalorder %s33, 1
        %s366 = scalar_select %p365, %s33, 1
        %s367 = smul.addr %s366, 2
        %s368 = smul.addr %s367, 4
        %s369 = scalar_lea.vmem %s1, %s368
        %s370 = smul.u32 2, %s34
        %s371 = smul.u32 2, %s34
        %s372 = smul.u32 2, %s34
        %v374 = vld [vmem:[%s363] sm:$0xf]
        %v375 = vld [vmem:[%s363 + $0x4] sm:$0xf]
        %v376 = vld [vmem:[%s369] sm:$0xf]
        %v377 = vld [vmem:[%s369 + $0x4] sm:$0xf]
        %v378 = vld [vmem:[%s295] sm:$0xf]
        %v379 = vld [vmem:[%s295 + $0x4] sm:$0xf]
        %v380 = vld [vmem:[%s304] sm:$0xf]
        %v381 = vld [vmem:[%s304 + $0x4] sm:$0xf]
        %v382 = vunpack.c.l.bf16 %v380
        %v383 = vunpack.c.l.bf16 %v381
        %v384 = vmul.f32 %v382, 1.4285715
        %v385 = vmul.f32 %v383, 1.4285715
        %v388 = vunpack.c.l.b16 %v374
        %v389 = vunpack.c.l.b16 %v375
        %v390 = vpack.c.b16 %v389, %v388
        %v393 = vunpack.c.l.b16 %v376
        %v394 = vunpack.c.l.b16 %v377
        %v395 = vpack.c.b16 %v394, %v393
        %vm396 = vcmask 64512
        %v398 = vsel %vm396, %v390, 0
        %v401 = vsel %vm396, %v395, 0
        %403 = vmatprep.subr.bf16.mxu0 0
        %404 = vmatpush1.bf16.xpose.msra.mxu0 %v401
        %405 = vmatprep.subr.bf16.mxu0 0
        %406 = vmatpush1.bf16.xpose.msra.mxu0 0
        %407 = vmatprep.subr.bf16.mxu0 0
        %408 = vmatpush1.bf16.xpose.msra.mxu0 0
        %409 = vmatprep.subr.bf16.mxu0 0
        %410 = vmatpush1.bf16.xpose.msra.mxu0 0
        %411 = vmatprep.subr.bf16.mxu0 0
        %412 = vmatpush1.bf16.xpose.msra.mxu0 0
        %413 = vmatprep.subr.bf16.mxu0 0
        %414 = vmatpush1.bf16.xpose.msra.mxu0 0
        %415 = vmatprep.subr.bf16.mxu0 0
        %416 = vmatpush1.bf16.xpose.msra.mxu0 0
        %417 = vmatprep.subr.bf16.mxu0 0
        %418 = vmatpush1.bf16.xpose.msra.mxu0 0
        %419 = vmatprep.subr.bf16.mxu0 0
        %420 = vmatpush1.bf16.xpose.msra.mxu0 0
        %421 = vmatprep.subr.bf16.mxu0 0
        %422 = vmatpush1.bf16.xpose.msra.mxu0 0
        %423 = vmatprep.subr.bf16.mxu0 0
        %424 = vmatpush1.bf16.xpose.msra.mxu0 0
        %425 = vmatprep.subr.bf16.mxu0 0
        %426 = vmatpush1.bf16.xpose.msra.mxu0 0
        %427 = vmatprep.subr.bf16.mxu0 0
        %428 = vmatpush1.bf16.xpose.msra.mxu0 0
        %429 = vmatprep.subr.bf16.mxu0 0
        %430 = vmatpush1.bf16.xpose.msra.mxu0 0
        %431 = vmatprep.subr.bf16.mxu0 0
        %432 = vmatpush1.bf16.xpose.msra.mxu0 0
        %433 = vmatprep.subr.bf16.mxu0 0
        %434 = vmatpush1.bf16.xpose.msra.mxu0 0
        %435 = vmatprep.mubr.bf16.mxu0 0
        %436 = vmatmul.mubr.bf16.gmra.mrb[0].mxu0 %v398
        %v437 = vpop.f32.mrb[0].mxu0
        %v438 = vadd.f32 %v384, %v437
        %v439 = vpop.f32.mrb[0].mxu0
        %v440 = vpop.f32.mrb[0].mxu0
        %v441 = vadd.f32 %v385, %v440
        %v442 = vpop.f32.mrb[0].mxu0
        %443 = vdwg.mxu0
        %vm444 = vcmask 130048
        %v445 = vsel %vm444, %v438, -inf
        %446 = vmax.xlane.f32.xlu0 %v445
        %v447 = vpop.xlane.xlu0 %446
        %v448 = vsel %vm444, %v441, -inf
        %449 = vmax.xlane.f32.xlu0 %v448
        %v450 = vpop.xlane.xlu0 %449
        %v451 = vsub.f32 %v438, %v447
        %v452 = vsub.f32 %v441, %v450
        %v453 = vmul.f32 %v451, 1.442695
        %v454 = vpow.pop %v453
        %v455 = vmul.f32 %v452, 1.442695
        %v456 = vpow.pop %v455
        %v457 = vsel %vm444, %v454, 0.0
        %458 = vadd.xlane.f32.xlu0 %v457
        %v459 = vpop.xlane.xlu0 %458
        %v460 = vsel %vm444, %v456, 0.0
        %461 = vadd.xlane.f32.xlu0 %v460
        %v462 = vpop.xlane.xlu0 %461
        %v463 = vrcp.pop %v459
        %v464 = vrcp.pop %v462
        %v465 = vmul.f32 %v454, %v463
        %v466 = vmul.f32 %v456, %v464
        %v467 = vpack.c.bf16 %v466, %v465
        %v469 = vunpack.c.l.b16 %v467
        %v470 = vunpack.c.h.b16 %v467
        %v471 = vpack.c.b16 %v469, %v469
        %v472 = vpack.c.b16 %v470, %v470
        %vm475 = vcmask 125952
        %476 = vst.msk [vmem:[%s354] sm:$0xf] %vm475, %v471
        %477 = vst.msk [vmem:[%s354 + $0x4] sm:$0xf] %vm475, %v472
        %v480 = vunpack.c.l.b16 %v378
        %v481 = vunpack.c.l.b16 %v379
        %v482 = vpack.c.b16 %v481, %v480
        %v485 = vsel %vm444, %v467, 0
        %487 = vmatprep.subr.bf16.mxu0 0
        %488 = vmatpush1.bf16.msra.mxu0 %v482
        %489 = vmatprep.subr.bf16.mxu0 0
        %490 = vmatpush1.bf16.msra.mxu0 0
        %491 = vmatprep.subr.bf16.mxu0 0
        %492 = vmatpush1.bf16.msra.mxu0 0
        %493 = vmatprep.subr.bf16.mxu0 0
        %494 = vmatpush1.bf16.msra.mxu0 0
        %495 = vmatprep.subr.bf16.mxu0 0
        %496 = vmatpush1.bf16.msra.mxu0 0
        %497 = vmatprep.subr.bf16.mxu0 0
        %498 = vmatpush1.bf16.msra.mxu0 0
        %499 = vmatprep.subr.bf16.mxu0 0
        %500 = vmatpush1.bf16.msra.mxu0 0
        %501 = vmatprep.subr.bf16.mxu0 0
        %502 = vmatpush1.bf16.msra.mxu0 0
        %503 = vmatprep.subr.bf16.mxu0 0
        %504 = vmatpush1.bf16.msra.mxu0 0
        %505 = vmatprep.subr.bf16.mxu0 0
        %506 = vmatpush1.bf16.msra.mxu0 0
        %507 = vmatprep.subr.bf16.mxu0 0
        %508 = vmatpush1.bf16.msra.mxu0 0
        %509 = vmatprep.subr.bf16.mxu0 0
        %510 = vmatpush1.bf16.msra.mxu0 0
        %511 = vmatprep.subr.bf16.mxu0 0
        %512 = vmatpush1.bf16.msra.mxu0 0
        %513 = vmatprep.subr.bf16.mxu0 0
        %514 = vmatpush1.bf16.msra.mxu0 0
        %515 = vmatprep.subr.bf16.mxu0 0
        %516 = vmatpush1.bf16.msra.mxu0 0
        %517 = vmatprep.subr.bf16.mxu0 0
        %518 = vmatpush1.bf16.msra.mxu0 0
        %519 = vmatprep.mubr.bf16.mxu0 0
        %520 = vmatmul.mubr.bf16.gmra.mrb[0].mxu0 %v485
        %v521 = vpop.f32.mrb[0].mxu0
        %v522 = vadd.f32 0.0, %v521
        %v523 = vpop.f32.mrb[0].mxu0
        %v524 = vpop.f32.mrb[0].mxu0
        %v525 = vadd.f32 0.0, %v524
        %v526 = vpop.f32.mrb[0].mxu0
        %527 = vdwg.mxu0
        %s528 = scalar_lea.vmem %s304, 8 [#allocation5]
        %v529 = vld [vmem:[%s528] sm:$0xf]
        %v530 = vld [vmem:[%s528 + $0x4] sm:$0xf]
        %v531 = vunpack.c.l.bf16 %v529
        %v532 = vunpack.c.l.bf16 %v530
        %v533 = vmul.f32 %v531, 1.4285715
        %v534 = vmul.f32 %v532, 1.4285715
        %535 = vrot.lane.b32.xlu0 %v395, 120
        %v536 = vpop.permute.xlu0 %535
        %v538 = vsel %vm396, %v536, 0
        %540 = vmatprep.subr.bf16.mxu0 0
        %541 = vmatpush1.bf16.xpose.msra.mxu0 %v538
        %542 = vmatprep.subr.bf16.mxu0 0
        %543 = vmatpush1.bf16.xpose.msra.mxu0 0
        %544 = vmatprep.subr.bf16.mxu0 0
        %545 = vmatpush1.bf16.xpose.msra.mxu0 0
        %546 = vmatprep.subr.bf16.mxu0 0
        %547 = vmatpush1.bf16.xpose.msra.mxu0 0
        %548 = vmatprep.subr.bf16.mxu0 0
        %549 = vmatpush1.bf16.xpose.msra.mxu0 0
        %550 = vmatprep.subr.bf16.mxu0 0
        %551 = vmatpush1.bf16.xpose.msra.mxu0 0
        %552 = vmatprep.subr.bf16.mxu0 0
        %553 = vmatpush1.bf16.xpose.msra.mxu0 0
        %554 = vmatprep.subr.bf16.mxu0 0
        %555 = vmatpush1.bf16.xpose.msra.mxu0 0
        %556 = vmatprep.subr.bf16.mxu0 0
        %557 = vmatpush1.bf16.xpose.msra.mxu0 0
        %558 = vmatprep.subr.bf16.mxu0 0
        %559 = vmatpush1.bf16.xpose.msra.mxu0 0
        %560 = vmatprep.subr.bf16.mxu0 0
        %561 = vmatpush1.bf16.xpose.msra.mxu0 0
        %562 = vmatprep.subr.bf16.mxu0 0
        %563 = vmatpush1.bf16.xpose.msra.mxu0 0
        %564 = vmatprep.subr.bf16.mxu0 0
        %565 = vmatpush1.bf16.xpose.msra.mxu0 0
        %566 = vmatprep.subr.bf16.mxu0 0
        %567 = vmatpush1.bf16.xpose.msra.mxu0 0
        %568 = vmatprep.subr.bf16.mxu0 0
        %569 = vmatpush1.bf16.xpose.msra.mxu0 0
        %570 = vmatprep.subr.bf16.mxu0 0
        %571 = vmatpush1.bf16.xpose.msra.mxu0 0
        %572 = vmatprep.mubr.bf16.mxu0 0
        %573 = vmatmul.mubr.bf16.gmra.mrb[0].mxu0 %v398
        %v574 = vpop.f32.mrb[0].mxu0
        %v575 = vadd.f32 %v533, %v574
        %v576 = vpop.f32.mrb[0].mxu0
        %v577 = vpop.f32.mrb[0].mxu0
        %v578 = vadd.f32 %v534, %v577
        %v579 = vpop.f32.mrb[0].mxu0
        %580 = vdwg.mxu0
        %v581 = vsel %vm444, %v575, -inf
        %582 = vmax.xlane.f32.xlu0 %v581
        %v583 = vpop.xlane.xlu0 %582
        %v584 = vsel %vm444, %v578, -inf
        %585 = vmax.xlane.f32.xlu0 %v584
        %v586 = vpop.xlane.xlu0 %585
        %v587 = vsub.f32 %v575, %v583
        %v588 = vsub.f32 %v578, %v586
        %v589 = vmul.f32 %v587, 1.442695
        %v590 = vpow.pop %v589
        %v591 = vmul.f32 %v588, 1.442695
        %v592 = vpow.pop %v591
        %v593 = vsel %vm444, %v590, 0.0
        %594 = vadd.xlane.f32.xlu0 %v593
        %v595 = vpop.xlane.xlu0 %594
        %v596 = vsel %vm444, %v592, 0.0
        %597 = vadd.xlane.f32.xlu0 %v596
        %v598 = vpop.xlane.xlu0 %597
        %v599 = vrcp.pop %v595
        %v600 = vrcp.pop %v598
        %v601 = vmul.f32 %v590, %v599
        %v602 = vmul.f32 %v592, %v600
        %v603 = vpack.c.bf16 %v602, %v601
        %v605 = vunpack.c.l.b16 %v603
        %v606 = vunpack.c.h.b16 %v603
        %v607 = vpack.c.b16 %v605, %v605
        %v608 = vpack.c.b16 %v606, %v606
        %s611 = scalar_lea.vmem %s354, 8 [#allocation8]
        %612 = vst.msk [vmem:[%s611] sm:$0xf] %vm475, %v607
        %613 = vst.msk [vmem:[%s611 + $0x4] sm:$0xf] %vm475, %v608
        %614 = vrot.lane.b32.xlu0 %v482, 120
        %v615 = vpop.permute.xlu0 %614
        %v618 = vsel %vm444, %v603, 0
        %620 = vmatprep.subr.bf16.mxu0 0
        %621 = vmatpush1.bf16.msra.mxu0 %v615
        %622 = vmatprep.subr.bf16.mxu0 0
        %623 = vmatpush1.bf16.msra.mxu0 0
        %624 = vmatprep.subr.bf16.mxu0 0
        %625 = vmatpush1.bf16.msra.mxu0 0
        %626 = vmatprep.subr.bf16.mxu0 0
        %627 = vmatpush1.bf16.msra.mxu0 0
        %628 = vmatprep.subr.bf16.mxu0 0
        %629 = vmatpush1.bf16.msra.mxu0 0
        %630 = vmatprep.subr.bf16.mxu0 0
        %631 = vmatpush1.bf16.msra.mxu0 0
        %632 = vmatprep.subr.bf16.mxu0 0
        %633 = vmatpush1.bf16.msra.mxu0 0
        %634 = vmatprep.subr.bf16.mxu0 0
        %635 = vmatpush1.bf16.msra.mxu0 0
        %636 = vmatprep.subr.bf16.mxu0 0
        %637 = vmatpush1.bf16.msra.mxu0 0
        %638 = vmatprep.subr.bf16.mxu0 0
        %639 = vmatpush1.bf16.msra.mxu0 0
        %640 = vmatprep.subr.bf16.mxu0 0
        %641 = vmatpush1.bf16.msra.mxu0 0
        %642 = vmatprep.subr.bf16.mxu0 0
        %643 = vmatpush1.bf16.msra.mxu0 0
        %644 = vmatprep.subr.bf16.mxu0 0
        %645 = vmatpush1.bf16.msra.mxu0 0
        %646 = vmatprep.subr.bf16.mxu0 0
        %647 = vmatpush1.bf16.msra.mxu0 0
        %648 = vmatprep.subr.bf16.mxu0 0
        %649 = vmatpush1.bf16.msra.mxu0 0
        %650 = vmatprep.subr.bf16.mxu0 0
        %651 = vmatpush1.bf16.msra.mxu0 0
        %652 = vmatprep.mubr.bf16.mxu0 0
        %653 = vmatmul.mubr.bf16.gmra.mrb[0].mxu0 %v618
        %v654 = vpop.f32.mrb[0].mxu0
        %v655 = vadd.f32 0.0, %v654
        %v656 = vpop.f32.mrb[0].mxu0
        %v657 = vpop.f32.mrb[0].mxu0
        %v658 = vadd.f32 0.0, %v657
        %v659 = vpop.f32.mrb[0].mxu0
        %660 = vdwg.mxu0
        %s661 = scalar_lea.vmem %s304, 16 [#allocation5]
        %v662 = vld [vmem:[%s661] sm:$0xf]
        %v663 = vld [vmem:[%s661 + $0x4] sm:$0xf]
        %v664 = vunpack.c.l.bf16 %v662
        %v665 = vunpack.c.l.bf16 %v663
        %v666 = vmul.f32 %v664, 1.4285715
        %v667 = vmul.f32 %v665, 1.4285715
        %668 = vrot.lane.b32.xlu0 %v395, 112
        %v669 = vpop.permute.xlu0 %668
        %v671 = vsel %vm396, %v669, 0
        %673 = vmatprep.subr.bf16.mxu0 0
        %674 = vmatpush1.bf16.xpose.msra.mxu0 %v671
        %675 = vmatprep.subr.bf16.mxu0 0
        %676 = vmatpush1.bf16.xpose.msra.mxu0 0
        %677 = vmatprep.subr.bf16.mxu0 0
        %678 = vmatpush1.bf16.xpose.msra.mxu0 0
        %679 = vmatprep.subr.bf16.mxu0 0
        %680 = vmatpush1.bf16.xpose.msra.mxu0 0
        %681 = vmatprep.subr.bf16.mxu0 0
        %682 = vmatpush1.bf16.xpose.msra.mxu0 0
        %683 = vmatprep.subr.bf16.mxu0 0
        %684 = vmatpush1.bf16.xpose.msra.mxu0 0
        %685 = vmatprep.subr.bf16.mxu0 0
        %686 = vmatpush1.bf16.xpose.msra.mxu0 0
        %687 = vmatprep.subr.bf16.mxu0 0
        %688 = vmatpush1.bf16.xpose.msra.mxu0 0
        %689 = vmatprep.subr.bf16.mxu0 0
        %690 = vmatpush1.bf16.xpose.msra.mxu0 0
        %691 = vmatprep.subr.bf16.mxu0 0
        %692 = vmatpush1.bf16.xpose.msra.mxu0 0
        %693 = vmatprep.subr.bf16.mxu0 0
        %694 = vmatpush1.bf16.xpose.msra.mxu0 0
        %695 = vmatprep.subr.bf16.mxu0 0
        %696 = vmatpush1.bf16.xpose.msra.mxu0 0
        %697 = vmatprep.subr.bf16.mxu0 0
        %698 = vmatpush1.bf16.xpose.msra.mxu0 0
        %699 = vmatprep.subr.bf16.mxu0 0
        %700 = vmatpush1.bf16.xpose.msra.mxu0 0
        %701 = vmatprep.subr.bf16.mxu0 0
        %702 = vmatpush1.bf16.xpose.msra.mxu0 0
        %703 = vmatprep.subr.bf16.mxu0 0
        %704 = vmatpush1.bf16.xpose.msra.mxu0 0
        %705 = vmatprep.mubr.bf16.mxu0 0
        %706 = vmatmul.mubr.bf16.gmra.mrb[0].mxu0 %v398
        %v707 = vpop.f32.mrb[0].mxu0
        %v708 = vadd.f32 %v666, %v707
        %v709 = vpop.f32.mrb[0].mxu0
        %v710 = vpop.f32.mrb[0].mxu0
        %v711 = vadd.f32 %v667, %v710
        %v712 = vpop.f32.mrb[0].mxu0
        %713 = vdwg.mxu0
        %v714 = vsel %vm444, %v708, -inf
        %715 = vmax.xlane.f32.xlu0 %v714
        %v716 = vpop.xlane.xlu0 %715
        %v717 = vsel %vm444, %v711, -inf
        %718 = vmax.xlane.f32.xlu0 %v717
        %v719 = vpop.xlane.xlu0 %718
        %v720 = vsub.f32 %v708, %v716
        %v721 = vsub.f32 %v711, %v719
        %v722 = vmul.f32 %v720, 1.442695
        %v723 = vpow.pop %v722
        %v724 = vmul.f32 %v721, 1.442695
        %v725 = vpow.pop %v724
        %v726 = vsel %vm444, %v723, 0.0
        %727 = vadd.xlane.f32.xlu0 %v726
        %v728 = vpop.xlane.xlu0 %727
        %v729 = vsel %vm444, %v725, 0.0
        %730 = vadd.xlane.f32.xlu0 %v729
        %v731 = vpop.xlane.xlu0 %730
        %v732 = vrcp.pop %v728
        %v733 = vrcp.pop %v731
        %v734 = vmul.f32 %v723, %v732
        %v735 = vmul.f32 %v725, %v733
        %v736 = vpack.c.bf16 %v735, %v734
        %v738 = vunpack.c.l.b16 %v736
        %v739 = vunpack.c.h.b16 %v736
        %v740 = vpack.c.b16 %v738, %v738
        %v741 = vpack.c.b16 %v739, %v739
        %s744 = scalar_lea.vmem %s354, 16 [#allocation8]
        %745 = vst.msk [vmem:[%s744] sm:$0xf] %vm475, %v740
        %746 = vst.msk [vmem:[%s744 + $0x4] sm:$0xf] %vm475, %v741
        %747 = vrot.lane.b32.xlu0 %v482, 112
        %v748 = vpop.permute.xlu0 %747
        %v751 = vsel %vm444, %v736, 0
        %753 = vmatprep.subr.bf16.mxu0 0
        %754 = vmatpush1.bf16.msra.mxu0 %v748
        %755 = vmatprep.subr.bf16.mxu0 0
        %756 = vmatpush1.bf16.msra.mxu0 0
        %757 = vmatprep.subr.bf16.mxu0 0
        %758 = vmatpush1.bf16.msra.mxu0 0
        %759 = vmatprep.subr.bf16.mxu0 0
        %760 = vmatpush1.bf16.msra.mxu0 0
        %761 = vmatprep.subr.bf16.mxu0 0
        %762 = vmatpush1.bf16.msra.mxu0 0
        %763 = vmatprep.subr.bf16.mxu0 0
        %764 = vmatpush1.bf16.msra.mxu0 0
        %765 = vmatprep.subr.bf16.mxu0 0
        %766 = vmatpush1.bf16.msra.mxu0 0
        %767 = vmatprep.subr.bf16.mxu0 0
        %768 = vmatpush1.bf16.msra.mxu0 0
        %769 = vmatprep.subr.bf16.mxu0 0
        %770 = vmatpush1.bf16.msra.mxu0 0
        %771 = vmatprep.subr.bf16.mxu0 0
        %772 = vmatpush1.bf16.msra.mxu0 0
        %773 = vmatprep.subr.bf16.mxu0 0
        %774 = vmatpush1.bf16.msra.mxu0 0
        %775 = vmatprep.subr.bf16.mxu0 0
        %776 = vmatpush1.bf16.msra.mxu0 0
        %777 = vmatprep.subr.bf16.mxu0 0
        %778 = vmatpush1.bf16.msra.mxu0 0
        %779 = vmatprep.subr.bf16.mxu0 0
        %780 = vmatpush1.bf16.msra.mxu0 0
        %781 = vmatprep.subr.bf16.mxu0 0
        %782 = vmatpush1.bf16.msra.mxu0 0
        %783 = vmatprep.subr.bf16.mxu0 0
        %784 = vmatpush1.bf16.msra.mxu0 0
        %785 = vmatprep.mubr.bf16.mxu0 0
        %786 = vmatmul.mubr.bf16.gmra.mrb[0].mxu0 %v751
        %v787 = vpop.f32.mrb[0].mxu0
        %v788 = vadd.f32 0.0, %v787
        %v789 = vpop.f32.mrb[0].mxu0
        %v790 = vpop.f32.mrb[0].mxu0
        %v791 = vadd.f32 0.0, %v790
        %v792 = vpop.f32.mrb[0].mxu0
        %793 = vdwg.mxu0
        %s794 = scalar_lea.vmem %s304, 24 [#allocation5]
        %v795 = vld [vmem:[%s794] sm:$0xf]
        %v796 = vld [vmem:[%s794 + $0x4] sm:$0xf]
        %v797 = vunpack.c.l.bf16 %v795
        %v798 = vunpack.c.l.bf16 %v796
        %v799 = vmul.f32 %v797, 1.4285715
        %v800 = vmul.f32 %v798, 1.4285715
        %801 = vrot.lane.b32.xlu0 %v395, 104
        %v802 = vpop.permute.xlu0 %801
        %v804 = vsel %vm396, %v802, 0
        %806 = vmatprep.subr.bf16.mxu0 0
        %807 = vmatpush1.bf16.xpose.msra.mxu0 %v804
        %808 = vmatprep.subr.bf16.mxu0 0
        %809 = vmatpush1.bf16.xpose.msra.mxu0 0
        %810 = vmatprep.subr.bf16.mxu0 0
        %811 = vmatpush1.bf16.xpose.msra.mxu0 0
        %812 = vmatprep.subr.bf16.mxu0 0
        %813 = vmatpush1.bf16.xpose.msra.mxu0 0
        %814 = vmatprep.subr.bf16.mxu0 0
        %815 = vmatpush1.bf16.xpose.msra.mxu0 0
        %816 = vmatprep.subr.bf16.mxu0 0
        %817 = vmatpush1.bf16.xpose.msra.mxu0 0
        %818 = vmatprep.subr.bf16.mxu0 0
        %819 = vmatpush1.bf16.xpose.msra.mxu0 0
        %820 = vmatprep.subr.bf16.mxu0 0
        %821 = vmatpush1.bf16.xpose.msra.mxu0 0
        %822 = vmatprep.subr.bf16.mxu0 0
        %823 = vmatpush1.bf16.xpose.msra.mxu0 0
        %824 = vmatprep.subr.bf16.mxu0 0
        %825 = vmatpush1.bf16.xpose.msra.mxu0 0
        %826 = vmatprep.subr.bf16.mxu0 0
        %827 = vmatpush1.bf16.xpose.msra.mxu0 0
        %828 = vmatprep.subr.bf16.mxu0 0
        %829 = vmatpush1.bf16.xpose.msra.mxu0 0
        %830 = vmatprep.subr.bf16.mxu0 0
        %831 = vmatpush1.bf16.xpose.msra.mxu0 0
        %832 = vmatprep.subr.bf16.mxu0 0
        %833 = vmatpush1.bf16.xpose.msra.mxu0 0
        %834 = vmatprep.subr.bf16.mxu0 0
        %835 = vmatpush1.bf16.xpose.msra.mxu0 0
        %836 = vmatprep.subr.bf16.mxu0 0
        %837 = vmatpush1.bf16.xpose.msra.mxu0 0
        %838 = vmatprep.mubr.bf16.mxu0 0
        %839 = vmatmul.mubr.bf16.gmra.mrb[0].mxu0 %v398
        %v840 = vpop.f32.mrb[0].mxu0
        %v841 = vadd.f32 %v799, %v840
        %v842 = vpop.f32.mrb[0].mxu0
        %v843 = vpop.f32.mrb[0].mxu0
        %v844 = vadd.f32 %v800, %v843
        %v845 = vpop.f32.mrb[0].mxu0
        %846 = vdwg.mxu0
        %v847 = vsel %vm444, %v841, -inf
        %848 = vmax.xlane.f32.xlu0 %v847
        %v849 = vpop.xlane.xlu0 %848
        %v850 = vsel %vm444, %v844, -inf
        %851 = vmax.xlane.f32.xlu0 %v850
        %v852 = vpop.xlane.xlu0 %851
        %v853 = vsub.f32 %v841, %v849
        %v854 = vsub.f32 %v844, %v852
        %v855 = vmul.f32 %v853, 1.442695
        %v856 = vpow.pop %v855
        %v857 = vmul.f32 %v854, 1.442695
        %v858 = vpow.pop %v857
        %v859 = vsel %vm444, %v856, 0.0
        %860 = vadd.xlane.f32.xlu0 %v859
        %v861 = vpop.xlane.xlu0 %860
        %v862 = vsel %vm444, %v858, 0.0
        %863 = vadd.xlane.f32.xlu0 %v862
        %v864 = vpop.xlane.xlu0 %863
        %v865 = vrcp.pop %v861
        %v866 = vrcp.pop %v864
        %v867 = vmul.f32 %v856, %v865
        %v868 = vmul.f32 %v858, %v866
        %v869 = vpack.c.bf16 %v868, %v867
        %v871 = vunpack.c.l.b16 %v869
        %v872 = vunpack.c.h.b16 %v869
        %v873 = vpack.c.b16 %v871, %v871
        %v874 = vpack.c.b16 %v872, %v872
        %s877 = scalar_lea.vmem %s354, 24 [#allocation8]
        %878 = vst.msk [vmem:[%s877] sm:$0xf] %vm475, %v873
        %879 = vst.msk [vmem:[%s877 + $0x4] sm:$0xf] %vm475, %v874
        %880 = vrot.lane.b32.xlu0 %v482, 104
        %v881 = vpop.permute.xlu0 %880
        %v884 = vsel %vm444, %v869, 0
        %886 = vmatprep.subr.bf16.mxu0 0
        %887 = vmatpush1.bf16.msra.mxu0 %v881
        %888 = vmatprep.subr.bf16.mxu0 0
        %889 = vmatpush1.bf16.msra.mxu0 0
        %890 = vmatprep.subr.bf16.mxu0 0
        %891 = vmatpush1.bf16.msra.mxu0 0
        %892 = vmatprep.subr.bf16.mxu0 0
        %893 = vmatpush1.bf16.msra.mxu0 0
        %894 = vmatprep.subr.bf16.mxu0 0
        %895 = vmatpush1.bf16.msra.mxu0 0
        %896 = vmatprep.subr.bf16.mxu0 0
        %897 = vmatpush1.bf16.msra.mxu0 0
        %898 = vmatprep.subr.bf16.mxu0 0
        %899 = vmatpush1.bf16.msra.mxu0 0
        %900 = vmatprep.subr.bf16.mxu0 0
        %901 = vmatpush1.bf16.msra.mxu0 0
        %902 = vmatprep.subr.bf16.mxu0 0
        %903 = vmatpush1.bf16.msra.mxu0 0
        %904 = vmatprep.subr.bf16.mxu0 0
        %905 = vmatpush1.bf16.msra.mxu0 0
        %906 = vmatprep.subr.bf16.mxu0 0
        %907 = vmatpush1.bf16.msra.mxu0 0
        %908 = vmatprep.subr.bf16.mxu0 0
        %909 = vmatpush1.bf16.msra.mxu0 0
        %910 = vmatprep.subr.bf16.mxu0 0
        %911 = vmatpush1.bf16.msra.mxu0 0
        %912 = vmatprep.subr.bf16.mxu0 0
        %913 = vmatpush1.bf16.msra.mxu0 0
        %914 = vmatprep.subr.bf16.mxu0 0
        %915 = vmatpush1.bf16.msra.mxu0 0
        %916 = vmatprep.subr.bf16.mxu0 0
        %917 = vmatpush1.bf16.msra.mxu0 0
        %918 = vmatprep.mubr.bf16.mxu0 0
        %919 = vmatmul.mubr.bf16.gmra.mrb[0].mxu0 %v884
        %v920 = vpop.f32.mrb[0].mxu0
        %v921 = vadd.f32 0.0, %v920
        %v922 = vpop.f32.mrb[0].mxu0
        %v923 = vpop.f32.mrb[0].mxu0
        %v924 = vadd.f32 0.0, %v923
        %v925 = vpop.f32.mrb[0].mxu0
        %926 = vdwg.mxu0
        %929 = vrot.lane.b32.xlu0 %v655, 8
        %v930 = vpop.permute.xlu0 %929
        %931 = vrot.lane.b32.xlu0 %v658, 8
        %v932 = vpop.permute.xlu0 %931
        %937 = vrot.lane.b32.xlu0 %v788, 16
        %v938 = vpop.permute.xlu0 %937
        %939 = vrot.lane.b32.xlu0 %v791, 16
        %v940 = vpop.permute.xlu0 %939
        %945 = vrot.lane.b32.xlu0 %v921, 24
        %v946 = vpop.permute.xlu0 %945
        %947 = vrot.lane.b32.xlu0 %v924, 24
        %v948 = vpop.permute.xlu0 %947
        %v951 = vsel %vm396, %v522, %v930
        %v952 = vsel %vm396, %v525, %v932
        %v953 = vsel %vm444, %v951, %v938
        %v954 = vsel %vm444, %v952, %v940
        %vm955 = vcmask 195584
        %v956 = vsel %vm955, %v953, %v946
        %v957 = vsel %vm955, %v954, %v948
        %vm958 = vcmask 261120
        %959 = vst.msk [vmem:[%s347] sm:$0xff] %vm958, %v956
        %960 = vst.msk [vmem:[%s347 + $0x8] sm:$0xff] %vm958, %v957
        %s961 = sand.u32 %s159, 1
        %s962 = scalar_lea.sflag [#allocation4], %s961
        %s963 = sand.u32 %s159, 1
        %s964 = smul.addr %s963, 16
        %s965 = scalar_lea.vmem [#allocation7], %s964
        %s966 = sand.u32 %s187, 1
        %s967 = scalar_lea.sflag [#allocation9], %s966
        %s968 = sand.u32 %s187, 1
        %s969 = smul.addr %s968, 32
        %s970 = scalar_lea.vmem [#allocation8], %s969
        // Predicated region
        $region45: #{tpu_custom_call.1} parent=35 // pred_check
          %p971 = pneg %p169
        $region46: #{tpu_custom_call.1} parent=35 // pred_check_branch
          %973 = sbr.rel (%p971) target = $region48
        $region47: #{tpu_custom_call.1} parent=35 // pred_region
          %s974 = smul.u32 2, %s34
          %s976 = ssub.s32 256, 256
          %977 = vsyncadd %s962, %s976
          %s978 = smul.addr %s33, 2
          %s979 = sadd.s32 %s974, %s978
          %s980 = smul.addr %s979, 128
          %s981 = scalar_lea.hbm %s4, %s980
          %s982 = sshll.u32 %s965, 4
          %s983 = int_to_ptr.vmem [resolvable:$true] %s982
          %988 = dma.vmem_to_hbm [thread:$0]  %s983, 256, %s981, %s962, 128, 128, 8
        $region48: #{tpu_custom_call.1} parent=35 // pred_fallthru
          _
        // Predicated region
        $region49: #{tpu_custom_call.1} parent=35 // pred_check
          %p989 = pneg %p197
        $region50: #{tpu_custom_call.1} parent=35 // pred_check_branch
          %991 = sbr.rel (%p989) target = $region52
        $region51: #{tpu_custom_call.1} parent=35 // pred_region
          %s992 = smul.u32 2, %s34
          %s994 = ssub.s32 512, 512
          %995 = vsyncadd %s967, %s994
          %s996 = smul.addr %s33, 8
          %s997 = sadd.s32 %s992, %s996
          %s998 = smul.addr %s997, 64
          %s999 = scalar_lea.hbm %s5, %s998
          %s1000 = sshll.u32 %s970, 4
          %s1001 = int_to_ptr.vmem [resolvable:$true] %s1000
          %1006 = dma.vmem_to_hbm [thread:$0]  %s1001, 512, %s999, %s967, 64, 64, 4
        $region52: #{tpu_custom_call.1} parent=35 // pred_fallthru
          _
      $region36: #{tpu_custom_call.1} parent=5 // pred_fallthru
        _
      %p1007 = scmp.le.s32.totalorder 2, %s24
      // Predicated region
      $region53: #{tpu_custom_call.1} parent=5 // pred_check
        %p1008 = pneg %p1007
      $region54: #{tpu_custom_call.1} parent=5 // pred_check_branch
        %1010 = sbr.rel (%p1008) target = $region56
      $region55: #{tpu_custom_call.1} parent=5 // pred_region
        %s1011 = ssub.s32 %s24, 2
        // Predicated region
        $region57: #{tpu_custom_call.1} parent=55 // pred_check
          %p1012 = pneg %p175
        $region58: #{tpu_custom_call.1} parent=55 // pred_check_branch
          %1014 = sbr.rel (%p1012) target = $region60
        $region59: #{tpu_custom_call.1} parent=55 // pred_region
          %s1015 = sand.u32 %s160, 1
          %s1016 = scalar_lea.sflag [#allocation4], %s1015
          %s1017 = sand.u32 %s160, 1
          %s1018 = smul.addr %s1017, 16
          %s1019 = scalar_lea.vmem [#allocation7], %s1018
          %1020 = dma.done %s1016, 256
        $region60: #{tpu_custom_call.1} parent=55 // pred_fallthru
          _
        // Predicated region
        $region61: #{tpu_custom_call.1} parent=55 // pred_check
          %p1021 = pneg %p203
        $region62: #{tpu_custom_call.1} parent=55 // pred_check_branch
          %1023 = sbr.rel (%p1021) target = $region64
        $region63: #{tpu_custom_call.1} parent=55 // pred_region
          %s1024 = sand.u32 %s188, 1
          %s1025 = scalar_lea.sflag [#allocation9], %s1024
          %s1026 = sand.u32 %s188, 1
          %s1027 = smul.addr %s1026, 32
          %s1028 = scalar_lea.vmem [#allocation8], %s1027
          %1029 = dma.done %s1025, 512
        $region64: #{tpu_custom_call.1} parent=55 // pred_fallthru
          _
      $region56: #{tpu_custom_call.1} parent=5 // pred_fallthru
        _
    $region6: #{tpu_custom_call.1} parent=1 // loop_footer
      %s28 = sadd.s32 1, %s24
    $region7: #{tpu_custom_call.1} parent=1 // loop_footer_branch
      %23 = sbr.rel target = $region3
    $region8: #{tpu_custom_call.1} parent=1 // loop_exit
      _
    %1030 = vsyncpa [#allocation3], 1
    %s1031 = scalar_lea.sflag [#allocation3], 1
    %1032 = vsyncpa %s1031, 1
    %1033 = vsyncpa [#allocation6], 1
    %s1034 = scalar_lea.sflag [#allocation6], 1
    %1035 = vsyncpa %s1034, 1
    %1036 = vsyncpa [#allocation4], 1
    %s1037 = scalar_lea.sflag [#allocation4], 1
    %1038 = vsyncpa %s1037, 1
    %1039 = vsyncpa [#allocation9], 1
    %s1040 = scalar_lea.sflag [#allocation9], 1
    %1041 = vsyncpa %s1040, 1

</llo_original>
